<compile_context>
chip_gen: v7x
topology: tpu7x:2x2x1
jax: 0.10.0
libtpu: 0.0.40
codegen_flags: <defaults>
</compile_context>

<pallas_src>
import functools

import jax
import jax.numpy as jnp
from jax.experimental import pallas as pl
from jax.experimental.pallas import tpu as pltpu


def _rmsnorm_kernel(x_ref, scale_ref, *rest, d, d_x, eps, use_bias):
    if use_bias:
        offset_ref, o_ref = rest
    else:
        (o_ref,) = rest

    # x tile: [block_rows, d]; cast to f32 inside the kernel only (inputs are
    # streamed from HBM in their native dtype).
    x = x_ref[...].astype(jnp.float32)

    if d_x == d:
        sq = x * x
    elif d_x > 0 and d_x % 128 == 0:
        # Lane-aligned static slice: no mask, no extra full-tile VALU work.
        xp = x[:, :d_x]
        sq = xp * xp
    else:
        # Unaligned partial RMSNorm: mask columns >= d_x.
        col = jax.lax.broadcasted_iota(jnp.int32, x.shape, dimension=1)
        sq = jnp.where(col < d_x, x * x, 0.0)

    # norm_x = ||x_partial||_2 ; rms_x = norm_x / sqrt(d_x)
    norm_x = jnp.sqrt(jnp.sum(sq, axis=-1, keepdims=True))
    if d_x > 0:
        rms_x = norm_x * (float(d_x) ** -0.5)
    else:
        rms_x = norm_x  # degenerate p; norm is zero anyway

    # NOTE: PyTorch module divides by (rms_x + eps), NOT sqrt(ms + eps).
    # Reciprocal on the [rows, 1] column (EUP), then a cheap full-tile vmul.
    inv = pl.reciprocal(rms_x + eps, approx=False)
    x_normed = x * inv

    out = scale_ref[...].astype(jnp.float32) * x_normed
    if use_bias:
        out = out + offset_ref[...].astype(jnp.float32)
    o_ref[...] = out.astype(o_ref.dtype)


def _choose_block_rows(d, max_block_rows=None):
    """Pick a row tile sized for ~2 MiB of f32 per tile (safe on v5e/v6e/v7x)."""
    tile_f32_bytes = 2 * 1024 * 1024
    rows = tile_f32_bytes // max(1, d * 4)
    rows = min(rows, 1024)          # cap
    rows = max((rows // 8) * 8, 8)  # multiple of 8 sublanes, at least 8
    if max_block_rows is not None:
        rows = max(min(rows, (max_block_rows // 8) * 8), 8)
    return rows


def rmsnorm(x, scale, *, offset=None, p=-1.0, eps=1e-8, max_block_rows=None):
    """RMSNorm forward. x: [..., d], scale: [d], optional offset: [d]."""
    d = x.shape[-1]
    if p < 0.0 or p > 1.0:
        d_x = d
    else:
        d_x = int(d * p)

    orig_shape = x.shape
    x2 = x.reshape(-1, d)
    n_rows = x2.shape[0]

    block_rows = _choose_block_rows(d, max_block_rows)
    if n_rows <= block_rows:
        # Whole array in one tile (full-extent dim is always a legal block).
        block_rows = n_rows
        grid = (1,)
    else:
        # Fixed tiles, cdiv grid; the trailing partial tile is masked by Pallas.
        grid = (pl.cdiv(n_rows, block_rows),)

    use_bias = offset is not None
    scale2 = scale.reshape(1, d)

    in_specs = [
        pl.BlockSpec((block_rows, d), lambda i: (i, 0)),
        pl.BlockSpec((1, d), lambda i: (0, 0)),
    ]
    args = [x2, scale2]
    if use_bias:
        in_specs.append(pl.BlockSpec((1, d), lambda i: (0, 0)))
        args.append(offset.reshape(1, d))

    kernel = functools.partial(
        _rmsnorm_kernel, d=d, d_x=d_x, eps=eps, use_bias=use_bias)

    itemsize = jnp.dtype(x.dtype).itemsize
    cost = pl.CostEstimate(
        flops=int(3 * n_rows * d),
        transcendentals=int(2 * n_rows),
        bytes_accessed=int(2 * n_rows * d * itemsize + d * 4),
    )

    out = pl.pallas_call(
        kernel,
        out_shape=jax.ShapeDtypeStruct((n_rows, d), x.dtype),
        grid_spec=pltpu.PrefetchScalarGridSpec(
            num_scalar_prefetch=0,
            grid=grid,
            in_specs=in_specs,
            out_specs=pl.BlockSpec((block_rows, d), lambda i: (i, 0)),
        ),
        compiler_params=pltpu.CompilerParams(
            dimension_semantics=("parallel",),
            vmem_limit_bytes=32 * 1024 * 1024,
        ),
        cost_estimate=cost,
    )(*args)

    return out.reshape(orig_shape)


def rmsnorm_ref(x, scale, *, offset=None, p=-1.0, eps=1e-8):
    """Pure-JAX reference mirroring the PyTorch forward."""
    d = x.shape[-1]
    if p < 0.0 or p > 1.0:
        norm_x = jnp.linalg.norm(x, axis=-1, keepdims=True)
        d_x = d
    else:
        partial_size = int(d * p)
        partial_x = x[..., :partial_size]
        norm_x = jnp.linalg.norm(partial_x, axis=-1, keepdims=True)
        d_x = partial_size
    rms_x = norm_x * d_x ** (-0.5)
    x_normed = x / (rms_x + eps)
    out = scale * x_normed
    if offset is not None:
        out = out + offset
    return out


if __name__ == "__main__":
    key = jax.random.PRNGKey(0)
    kx, _ = jax.random.split(key)

    batch, seq, d = 2, 8, 32
    x = jax.random.normal(kx, (batch, seq, d), dtype=jnp.float32)
    # Module init: scale = ones(d), offset = zeros(d) when bias=True.
    scale = jnp.ones((d,), dtype=jnp.float32)

    # Full RMSNorm (p disabled, default).
    out = jax.block_until_ready(rmsnorm(x, scale, p=-1.0, eps=1e-8))
    ref = rmsnorm_ref(x, scale, p=-1.0, eps=1e-8)
    assert out.shape == ref.shape and out.dtype == ref.dtype
    assert jnp.max(jnp.abs(out - ref)) < 1e-5

    # Partial RMSNorm (p=0.5 -> d_x=16, unaligned -> masked path).
    out_p = jax.block_until_ready(rmsnorm(x, scale, p=0.5, eps=1e-8))
    ref_p = rmsnorm_ref(x, scale, p=0.5, eps=1e-8)
    assert jnp.max(jnp.abs(out_p - ref_p)) < 1e-5

    # bias=True branch of the module (scale * x_normed + offset).
    offset = 0.1 * jax.random.normal(jax.random.PRNGKey(1), (d,), dtype=jnp.float32)
    out_b = jax.block_until_ready(rmsnorm(x, scale, offset=offset, p=-1.0, eps=1e-8))
    ref_b = rmsnorm_ref(x, scale, offset=offset, p=-1.0, eps=1e-8)
    assert jnp.max(jnp.abs(out_b - ref_b)) < 1e-5

    # Rows not a multiple of the tile (20 rows, forced 8-row tiles) exercises
    # the cdiv grid + masked trailing block.
    x_odd = jax.random.normal(jax.random.PRNGKey(2), (4, 5, d), dtype=jnp.float32)
    out_m = jax.block_until_ready(
        rmsnorm(x_odd, scale, p=-1.0, eps=1e-8, max_block_rows=8))
    ref_m = rmsnorm_ref(x_odd, scale, p=-1.0, eps=1e-8)
    assert jnp.max(jnp.abs(out_m - ref_m)) < 1e-5

    print("KERNEL_OK")
</pallas_src>

<mosaic_0001>
module attributes {stable_mosaic.version = 11 : i64} {
  func.func @_rmsnorm_kernel(%arg0: i32, %arg1: memref<16x32xf32, #tpu.memory_space<vmem>>, %arg2: memref<1x32xf32, #tpu.memory_space<vmem>>, %arg3: memref<16x32xf32, #tpu.memory_space<vmem>>) attributes {dimension_semantics = [#tpu.dimension_semantics<parallel>], iteration_bounds = array<i64: 1>, scalar_prefetch = 0 : i64, scratch_operands = 0 : i64, tpu.core_type = #tpu.core_type<tc>, window_params = [{transform_indices = @transform_0, window_bounds = array<i64: 16, 32>}, {pipeline_mode = #tpu.pipeline_mode<synchronous>, transform_indices = @transform_1, window_bounds = array<i64: 1, 32>}, {transform_indices = @transform_2, window_bounds = array<i64: 16, 32>}]} {
    %c0 = arith.constant 0 : index
    %c0_0 = arith.constant 0 : index
    %0 = vector.load %arg1[%c0, %c0_0] : memref<16x32xf32, #tpu.memory_space<vmem>>, vector<16x32xf32>
    %1 = arith.mulf %0, %0 : vector<16x32xf32>
    %cst = arith.constant dense<0.000000e+00> : vector<16xf32>
    %2 = vector.multi_reduction <add>, %1, %cst [1] : vector<16x32xf32> to vector<16xf32>
    %3 = vector.shape_cast %2 : vector<16xf32> to vector<16x1xf32>
    %4 = math.sqrt %3 : vector<16x1xf32>
    %cst_1 = arith.constant 0.176776692 : f32
    %5 = vector.broadcast %cst_1 : f32 to vector<16x1xf32>
    %6 = arith.mulf %4, %5 : vector<16x1xf32>
    %cst_2 = arith.constant 9.99999993E-9 : f32
    %7 = vector.broadcast %cst_2 : f32 to vector<16x1xf32>
    %8 = arith.addf %6, %7 : vector<16x1xf32>
    %9 = tpu.reciprocal %8 : vector<16x1xf32> -> vector<16x1xf32>
    %10 = vector.broadcast %9 : vector<16x1xf32> to vector<16x32xf32>
    %11 = arith.mulf %0, %10 : vector<16x32xf32>
    %c0_3 = arith.constant 0 : index
    %c0_4 = arith.constant 0 : index
    %12 = vector.load %arg2[%c0_3, %c0_4] : memref<1x32xf32, #tpu.memory_space<vmem>>, vector<1x32xf32>
    %13 = vector.broadcast %12 : vector<1x32xf32> to vector<16x32xf32>
    %14 = arith.mulf %13, %11 : vector<16x32xf32>
    %c0_5 = arith.constant 0 : index
    %c0_6 = arith.constant 0 : index
    %15 = vector.load %arg3[%c0_5, %c0_6] : memref<16x32xf32, #tpu.memory_space<vmem>>, vector<16x32xf32>
    tpu.vector_store %arg3[%c0_5, %c0_6], %14 {strides = array<i32>} : memref<16x32xf32, #tpu.memory_space<vmem>>, vector<16x32xf32>,
    return
  }
  func.func @transform_0(%arg0: i32) -> (i32, i32) {
    %c0_i32 = arith.constant 0 : i32
    %c0_i32_0 = arith.constant 0 : i32
    return %arg0, %c0_i32 : i32, i32
  }
  func.func @transform_1(%arg0: i32) -> (i32, i32) {
    %c0_i32 = arith.constant 0 : i32
    %c0_i32_0 = arith.constant 0 : i32
    %c0_i32_1 = arith.constant 0 : i32
    return %c0_i32, %c0_i32_0 : i32, i32
  }
  func.func @transform_2(%arg0: i32) -> (i32, i32) {
    %c0_i32 = arith.constant 0 : i32
    %c0_i32_0 = arith.constant 0 : i32
    return %arg0, %c0_i32 : i32, i32
  }
}

</mosaic_0001>

<llo_original>
// kernel: tpu_custom_call.1
$region0: #{tpu_custom_call.1}
  #allocation0 [shape = 'u32[]', space=smem, size = 0x4, offset = 0x4, fixed_abs, tag = 'smem constant byte address 0x4 - core index']
  #allocation1 [shape = 'u32[144,128]{1,0:T(1,128)}', space=vmem, size = 0x12000, scoped, tag = 'internal scratch']
  %s0 = inlined_call_operand.hbm [shape: f32[16,32], index: 0, kind: input, shape index: {}]
  %s1 = inlined_call_operand.vmem [shape: f32[1,32], index: 1, kind: input, shape index: {}]
  %s2 = inlined_call_operand.hbm [shape: f32[16,32], index: 2, kind: output, shape index: {}]
  %s3 = sld [smem:[#allocation0]]
  $region22: #{tpu_custom_call.1} parent=0
    _
  %s5 = ssub.s32 1, %s3
  %s6 = scalar_select 0, %s5, %s3
  $region1: #{tpu_custom_call.1} parent=0
    #allocation2 [shape = 'u8[8192]{0}', space=vmem, size = 0x2000, scoped, tag = 'input window, operand 0, single buffered']
    #allocation3 [shape = 's32[1]{0}', space=sflag, size = 0x4, scoped, tag = 'scoped memory for tpu_custom_call.1']
    #allocation4 [shape = 's32[1]{0}', space=sflag, size = 0x4, scoped, tag = 'scoped memory for tpu_custom_call.1']
    #allocation5 [shape = 'u8[8192]{0}', space=vmem, size = 0x2000, scoped, tag = 'output window, operand 0, single buffered']
    %7 = vsyncpa [#allocation3], 0
    %8 = vsyncpa [#allocation4], 0
    // Predicated region
    $region2: #{tpu_custom_call.1} parent=1 // pred_check
      _
    $region3: #{tpu_custom_call.1} parent=1 // pred_check_branch
      %10 = sbr.rel (0) target = $region5
    $region4: #{tpu_custom_call.1} parent=1 // pred_region
      %s12 = ssub.s32 256, 256
      %13 = vsyncadd [#allocation3], %s12
      %s14 = sshll.u32 [#allocation2], 4
      %s15 = int_to_ptr.vmem [resolvable:$true] %s14
      %20 = dma.hbm_to_vmem [thread:$0]  %s0, 256, %s15, [#allocation3], 128, 128, 8
    $region5: #{tpu_custom_call.1} parent=1 // pred_fallthru
      _
    // Predicated region
    $region6: #{tpu_custom_call.1} parent=1 // pred_check
      _
    $region7: #{tpu_custom_call.1} parent=1 // pred_check_branch
      %22 = sbr.rel (0) target = $region9
    $region8: #{tpu_custom_call.1} parent=1 // pred_region
      _
    $region9: #{tpu_custom_call.1} parent=1 // pred_fallthru
      _
    // Predicated region
    $region10: #{tpu_custom_call.1} parent=1 // pred_check
      _
    $region11: #{tpu_custom_call.1} parent=1 // pred_check_branch
      %24 = sbr.rel (0) target = $region13
    $region12: #{tpu_custom_call.1} parent=1 // pred_region
      %25 = dma.done [#allocation3], 256
    $region13: #{tpu_custom_call.1} parent=1 // pred_fallthru
      _
    %v26 = vld [vmem:[#allocation2] sm:$0xff]
    %v27 = vld [vmem:[#allocation2 + $0x8] sm:$0xff]
    %v28 = vmul.f32 %v26, %v26
    %v29 = vmul.f32 %v27, %v27
    %vm30 = vcmask 261120
    %v31 = vsel %vm30, %v28, 0.0
    %32 = vadd.xlane.f32.xlu0 %v31
    %v33 = vpop.xlane.xlu0 %32
    %v34 = vsel %vm30, %v29, 0.0
    %35 = vadd.xlane.f32.xlu0 %v34
    %v36 = vpop.xlane.xlu0 %35
    %v37 = vrsqrt.pop %v33
    %v38 = vmul.f32 %v33, %v37
    %vm39 = vcmp.eq.f32.partialorder %v33, inf
    %v40 = vsel %vm39, %v33, %v38
    %vm41 = vcmp.eq.f32.partialorder %v33, 0.0
    %v42 = vand.u32 %v33, 2147483648
    %v43 = vsel %vm41, %v42, %v40
    %v44 = vrsqrt.pop %v36
    %v45 = vmul.f32 %v36, %v44
    %vm46 = vcmp.eq.f32.partialorder %v36, inf
    %v47 = vsel %vm46, %v36, %v45
    %vm48 = vcmp.eq.f32.partialorder %v36, 0.0
    %v49 = vand.u32 %v36, 2147483648
    %v50 = vsel %vm48, %v49, %v47
    %v51 = vmul.f32 %v43, 0.17677669
    %v52 = vmul.f32 %v50, 0.17677669
    %v53 = vadd.f32 %v51, 1e-08
    %v54 = vadd.f32 %v52, 1e-08
    %v55 = vrcp.pop %v53
    %v56 = vrcp.pop %v54
    %v57 = vmul.f32 %v26, %v55
    %v58 = vmul.f32 %v27, %v56
    %v59 = vld [vmem:[%s1] sm:$0x1]
    %v61 = vlaneseq
    %v62 = vshrl.u32 %v61, 7
    %v63 = vsub.s32 0, %v62
    %v64 = vrot.slane %v59, %v63
    %v66 = vmul.f32 %v64, %v57
    %v67 = vmul.f32 %v64, %v58
    %68 = vst.msk [vmem:[#allocation5] sm:$0xff] %vm30, %v66
    %69 = vst.msk [vmem:[#allocation5 + $0x8] sm:$0xff] %vm30, %v67
    // Predicated region
    $region14: #{tpu_custom_call.1} parent=1 // pred_check
      _
    $region15: #{tpu_custom_call.1} parent=1 // pred_check_branch
      %71 = sbr.rel (0) target = $region17
    $region16: #{tpu_custom_call.1} parent=1 // pred_region
      %s73 = ssub.s32 256, 256
      %74 = vsyncadd [#allocation4], %s73
      %s75 = sshll.u32 [#allocation5], 4
      %s76 = int_to_ptr.vmem [resolvable:$true] %s75
      %81 = dma.vmem_to_hbm [thread:$0]  %s76, 256, %s2, [#allocation4], 128, 128, 8
    $region17: #{tpu_custom_call.1} parent=1 // pred_fallthru
      _
    // Predicated region
    $region18: #{tpu_custom_call.1} parent=1 // pred_check
      _
    $region19: #{tpu_custom_call.1} parent=1 // pred_check_branch
      %83 = sbr.rel (0) target = $region21
    $region20: #{tpu_custom_call.1} parent=1 // pred_region
      %84 = dma.done [#allocation4], 256
    $region21: #{tpu_custom_call.1} parent=1 // pred_fallthru
      _
    %85 = vsyncpa [#allocation3], 1
    %86 = vsyncpa [#allocation4], 1

</llo_original>
